<compile_context>
chip_gen: v5e
topology: v5e:2x2
jax: 0.10.0
libtpu: 0.0.40
codegen_flags: <defaults>
</compile_context>

<pallas_src>
import functools

import jax
import jax.numpy as jnp
from jax.experimental import pallas as pl
from jax.experimental.pallas import tpu as pltpu

EPS = 1e-5


def _round_up(a, m):
    return ((a + m - 1) // m) * m


def _cln2d_kernel(x_ref, gain_ref, bias_ref, o_ref, tri_ref, carry_ref,
                  *, cf_true, t_tile, t_total, eps):
    """Process one (C, t_tile, F) block of one batch item.

    Grid = (B, T_tiles), T innermost ('arbitrary').  carry_ref (1, 2) holds the
    running [cum_sum, cum_sum_sq] across T tiles; tri_ref holds the in-kernel
    generated lower-triangular cumsum operator.
    """
    tt = pl.program_id(1)

    # Start of each batch item: reset the running statistics and (re)build the
    # triangular operator.  Scratch is per-core, so build it at tt == 0 (not
    # only on the very first grid step) — this stays correct when the
    # 'parallel' B axis is split across TensorCores.
    @pl.when(tt == 0)
    def _():
        carry_ref[...] = jnp.zeros_like(carry_ref)
        row = jax.lax.broadcasted_iota(jnp.int32, (t_tile, t_tile), 0)
        col = jax.lax.broadcasted_iota(jnp.int32, (t_tile, t_tile), 1)
        tri_ref[...] = (row >= col).astype(jnp.float32)

    x = x_ref[...].astype(jnp.float32)                      # (C, t_tile, F)

    # Per-time-step sum / sum-of-squares over channel + frequency.
    s3 = jnp.sum(x, axis=-1, keepdims=True)                 # (C, t_tile, 1)
    p3 = jnp.sum(x * x, axis=-1, keepdims=True)             # (C, t_tile, 1)
    s = jnp.sum(s3, axis=0)                                 # (t_tile, 1)
    p = jnp.sum(p3, axis=0)                                 # (t_tile, 1)

    # Mask time rows beyond the true sequence length (ragged last tile) so
    # out-of-bounds garbage never pollutes the running sums.
    local_t = jax.lax.broadcasted_iota(jnp.int32, (t_tile, 1), 0)
    global_t = tt * t_tile + local_t                        # (t_tile, 1) int32
    valid = global_t < t_total
    s = jnp.where(valid, s, 0.0)
    p = jnp.where(valid, p, 0.0)

    # Fused within-tile inclusive cumsum of [s, p]: a single tiny MXU matmul
    # (exact f32 via HIGHEST precision), then add the carried prefix.
    sp = jnp.concatenate([s, p], axis=-1)                   # (t_tile, 2)
    cum_sp = jnp.dot(tri_ref[...], sp,
                     precision=jax.lax.Precision.HIGHEST,
                     preferred_element_type=jnp.float32)    # (t_tile, 2)
    carry = carry_ref[...]                                  # (1, 2)
    cum_sp = cum_sp + carry
    carry_ref[...] = carry + jnp.sum(sp, axis=0, keepdims=True)

    cum_s = cum_sp[:, 0:1]                                  # (t_tile, 1)
    cum_p = cum_sp[:, 1:2]

    # entry_cnt[t] = C*F * (t + 1), built directly in f32 (no int32 overflow
    # for very long T with large C*F); only t_tile divides per grid step.
    cnt = (global_t.astype(jnp.float32) + 1.0) * float(cf_true)
    inv_cnt = 1.0 / cnt
    cum_mean = cum_s * inv_cnt
    cum_var = (cum_p - 2.0 * cum_mean * cum_s) * inv_cnt + cum_mean * cum_mean
    inv_std = jax.lax.rsqrt(cum_var + eps)                  # EUP rsqrt

    gain = gain_ref[...].astype(jnp.float32)                # (C, 1, F)
    bias = bias_ref[...].astype(jnp.float32)
    mean_b = cum_mean[None, :, :]                           # (1, t_tile, 1)
    istd_b = inv_std[None, :, :]

    # Hot elementwise pass: multiply by inv_std (no per-element divide).
    out = (x - mean_b) * istd_b * gain + bias               # (C, t_tile, F)
    o_ref[...] = out.astype(o_ref.dtype)


def cumulative_layer_norm_2d(x, gain, bias, eps=EPS):
    """x: (B, C, T, F); gain/bias: (1, C, 1, F) -> (B, C, T, F)."""
    B, C, T, Fq = x.shape
    out_dtype = x.dtype

    # Parameters: drop the size-1 batch/time dims (metadata-only reshape).
    g = gain.reshape(C, 1, Fq)
    b_ = bias.reshape(C, 1, Fq)

    # ---- tile the time axis -------------------------------------------------
    # VMEM footprint of one block is C * t_tile * round_up(F, 128) * 4 bytes
    # (lanes pad to 128 in VMEM); target ~4 MiB/block on 128-MiB-VMEM parts
    # (v5e/v6e) and ~3 MiB on v7x (64 MiB per TC).  t_tile capped at 512 so the
    # in-kernel triangular operator stays <= 1 MiB.
    try:
        vmem_cap = pltpu.get_tpu_info().vmem_capacity_bytes
    except Exception:
        vmem_cap = 64 << 20                                  # conservative
    f_vmem = _round_up(Fq, 128)
    row_vmem = C * f_vmem * 4
    tgt_block = (4 << 20) if vmem_cap >= (100 << 20) else (3 << 20)
    t_cap = max(8, min(512, (tgt_block // row_vmem) // 8 * 8))
    t_tile = T if T <= t_cap else t_cap      # == full T dim, or multiple of 8
    n_t = -(-T // t_tile)

    # ---- honest VMEM budget (was a dead constant before) --------------------
    blk_vmem = C * t_tile * f_vmem * 4                       # one f32 block
    tri_bytes = t_tile * t_tile * 4
    par_bytes = 2 * C * 8 * f_vmem * 4                       # gain + bias
    # 2x double-buffered streams (x in, out) + tri + params + ~2 blocks of
    # in-kernel f32 temporaries.
    footprint = 4 * blk_vmem + tri_bytes + 2 * par_bytes + 2 * blk_vmem
    ceiling = (96 << 20) if vmem_cap >= (100 << 20) else (48 << 20)
    vmem_limit = int(min(ceiling, max(32 << 20, footprint + (8 << 20))))

    kernel = functools.partial(_cln2d_kernel, cf_true=C * Fq, t_tile=t_tile,
                               t_total=T, eps=eps)

    # TODO(synk): for v7x with B < 2, a two-pass variant (per-tile stats +
    # tiny prefix pass, then a fully-'parallel' normalize pass) would keep both
    # TensorCores busy; this single-pass carry keeps the T axis sequential.
    return pl.pallas_call(
        kernel,
        out_shape=jax.ShapeDtypeStruct((B, C, T, Fq), out_dtype),
        grid_spec=pltpu.PrefetchScalarGridSpec(
            num_scalar_prefetch=0,
            grid=(B, n_t),
            in_specs=[
                pl.BlockSpec((None, C, t_tile, Fq), lambda b, t: (b, 0, t, 0)),
                pl.BlockSpec((C, 1, Fq), lambda b, t: (0, 0, 0)),
                pl.BlockSpec((C, 1, Fq), lambda b, t: (0, 0, 0)),
            ],
            out_specs=pl.BlockSpec((None, C, t_tile, Fq),
                                   lambda b, t: (b, 0, t, 0)),
            scratch_shapes=[pltpu.VMEM((t_tile, t_tile), jnp.float32),
                            pltpu.VMEM((1, 2), jnp.float32)],
        ),
        compiler_params=pltpu.CompilerParams(
            dimension_semantics=("parallel", "arbitrary"),
            vmem_limit_bytes=vmem_limit,
        ),
    )(x, g, b_)


def _reference(x, gain, bias, eps=EPS):
    # Pure-JAX reference mirroring the PyTorch forward.
    B, C, T, Fq = x.shape
    step_sum = x.sum(axis=(1, 3), keepdims=True)
    step_pow = (x * x).sum(axis=(1, 3), keepdims=True)
    cum_sum = jnp.cumsum(step_sum, axis=2)
    cum_pow = jnp.cumsum(step_pow, axis=2)
    entry_cnt = (jnp.arange(1, T + 1, dtype=x.dtype) * (C * Fq)).reshape(1, 1, T, 1)
    cum_mean = cum_sum / entry_cnt
    cum_var = (cum_pow - 2.0 * cum_mean * cum_sum) / entry_cnt + cum_mean ** 2
    cum_std = jnp.sqrt(cum_var + eps)
    return (x - cum_mean) / cum_std * gain + bias


if __name__ == "__main__":
    # Module config: frequency_num=16, channel_num=4; input (B, C, T, F).
    B, C, T, Fq = 2, 4, 16, 16

    key = jax.random.PRNGKey(0)
    kx, kg, kb = jax.random.split(key, 3)
    x = jax.random.normal(kx, (B, C, T, Fq), dtype=jnp.float32)

    # Deterministic parameter init; perturb ones/zeros so the affine path is
    # actually exercised.
    gain = jnp.ones((1, C, 1, Fq), jnp.float32) + 0.1 * jax.random.normal(
        kg, (1, C, 1, Fq), dtype=jnp.float32)
    bias = jnp.zeros((1, C, 1, Fq), jnp.float32) + 0.1 * jax.random.normal(
        kb, (1, C, 1, Fq), dtype=jnp.float32)

    out = jax.block_until_ready(cumulative_layer_norm_2d(x, gain, bias))
    ref = _reference(x, gain, bias)

    assert out.shape == (B, C, T, Fq)
    assert jnp.allclose(out, ref, atol=1e-4, rtol=1e-4), "mismatch vs reference"

    print("KERNEL_OK")
</pallas_src>

<mosaic_0001>
module attributes {stable_mosaic.version = 11 : i64} {
  func.func @_cln2d_kernel(%arg0: i32, %arg1: i32, %arg2: memref<1x4x16x16xf32, #tpu.memory_space<vmem>>, %arg3: memref<4x1x16xf32, #tpu.memory_space<vmem>>, %arg4: memref<4x1x16xf32, #tpu.memory_space<vmem>>, %arg5: memref<1x4x16x16xf32, #tpu.memory_space<vmem>>, %arg6: memref<16x16xf32, #tpu.memory_space<vmem>>, %arg7: memref<1x2xf32, #tpu.memory_space<vmem>>) attributes {dimension_semantics = [#tpu.dimension_semantics<parallel>, #tpu.dimension_semantics<arbitrary>], iteration_bounds = array<i64: 2, 1>, scalar_prefetch = 0 : i64, scratch_operands = 2 : i64, tpu.core_type = #tpu.core_type<tc>, window_params = [{transform_indices = @transform_0, window_bounds = array<i64: 1, 4, 16, 16>}, {pipeline_mode = #tpu.pipeline_mode<synchronous>, transform_indices = @transform_1, window_bounds = array<i64: 4, 1, 16>}, {pipeline_mode = #tpu.pipeline_mode<synchronous>, transform_indices = @transform_2, window_bounds = array<i64: 4, 1, 16>}, {transform_indices = @transform_3, window_bounds = array<i64: 1, 4, 16, 16>}]} {
    %c0_i32 = arith.constant 0 : i32
    %0 = arith.cmpi eq, %arg1, %c0_i32 : i32
    %1 = arith.extui %0 : i1 to i32
    %c0_i32_0 = arith.constant 0 : i32
    %2 = arith.cmpi ne, %1, %c0_i32_0 : i32
    scf.if %2 {
      %cst_33 = arith.constant 0.000000e+00 : f32
      %67 = vector.broadcast %cst_33 : f32 to vector<1x2xf32>
      %c0_34 = arith.constant 0 : index
      %c0_35 = arith.constant 0 : index
      %68 = vector.load %arg7[%c0_34, %c0_35] : memref<1x2xf32, #tpu.memory_space<vmem>>, vector<1x2xf32>
      tpu.vector_store %arg7[%c0_34, %c0_35], %67 {strides = array<i32>} : memref<1x2xf32, #tpu.memory_space<vmem>>, vector<1x2xf32>,
      %69 = tpu.iota {dimensions = array<i32: 0>} : vector<16x16xi32>
      %70 = tpu.iota {dimensions = array<i32: 1>} : vector<16x16xi32>
      %71 = arith.cmpi sge, %69, %70 : vector<16x16xi32>
      %72 = arith.extui %71 : vector<16x16xi1> to vector<16x16xi32>
      %73 = arith.sitofp %72 : vector<16x16xi32> to vector<16x16xf32>
      %c0_36 = arith.constant 0 : index
      %c0_37 = arith.constant 0 : index
      %74 = vector.load %arg6[%c0_36, %c0_37] : memref<16x16xf32, #tpu.memory_space<vmem>>, vector<16x16xf32>
      tpu.vector_store %arg6[%c0_36, %c0_37], %73 {strides = array<i32>} : memref<16x16xf32, #tpu.memory_space<vmem>>, vector<16x16xf32>,
    } else {
    }
    %c0 = arith.constant 0 : index
    %c0_1 = arith.constant 0 : index
    %c0_2 = arith.constant 0 : index
    %c0_3 = arith.constant 0 : index
    %3 = vector.load %arg2[%c0, %c0_1, %c0_2, %c0_3] : memref<1x4x16x16xf32, #tpu.memory_space<vmem>>, vector<1x4x16x16xf32>
    %4 = vector.shape_cast %3 : vector<1x4x16x16xf32> to vector<4x16x16xf32>
    %cst = arith.constant dense<0.000000e+00> : vector<4x16xf32>
    %5 = vector.multi_reduction <add>, %4, %cst [2] : vector<4x16x16xf32> to vector<4x16xf32>
    %6 = vector.shape_cast %5 : vector<4x16xf32> to vector<4x16x1xf32>
    %7 = arith.mulf %4, %4 : vector<4x16x16xf32>
    %cst_4 = arith.constant dense<0.000000e+00> : vector<4x16xf32>
    %8 = vector.multi_reduction <add>, %7, %cst_4 [2] : vector<4x16x16xf32> to vector<4x16xf32>
    %9 = vector.shape_cast %8 : vector<4x16xf32> to vector<4x16x1xf32>
    %cst_5 = arith.constant dense<0.000000e+00> : vector<16x1xf32>
    %10 = vector.multi_reduction <add>, %6, %cst_5 [0] : vector<4x16x1xf32> to vector<16x1xf32>
    %cst_6 = arith.constant dense<0.000000e+00> : vector<16x1xf32>
    %11 = vector.multi_reduction <add>, %9, %cst_6 [0] : vector<4x16x1xf32> to vector<16x1xf32>
    %12 = tpu.iota {dimensions = array<i32: 0>} : vector<16x1xi32>
    %c16_i32 = arith.constant 16 : i32
    %13 = arith.muli %arg1, %c16_i32 : i32
    %14 = vector.broadcast %13 : i32 to vector<16x1xi32>
    %15 = arith.addi %14, %12 : vector<16x1xi32>
    %c16_i32_7 = arith.constant 16 : i32
    %16 = vector.broadcast %c16_i32_7 : i32 to vector<16x1xi32>
    %17 = arith.cmpi slt, %15, %16 : vector<16x1xi32>
    %cst_8 = arith.constant 0.000000e+00 : f32
    %18 = vector.broadcast %cst_8 : f32 to vector<16x1xf32>
    %19 = arith.select %17, %10, %18 : vector<16x1xi1>, vector<16x1xf32>
    %cst_9 = arith.constant 0.000000e+00 : f32
    %20 = vector.broadcast %cst_9 : f32 to vector<16x1xf32>
    %21 = arith.select %17, %11, %20 : vector<16x1xi1>, vector<16x1xf32>
    %22 = tpu.concatenate %19, %21 in 1 : vector<16x1xf32>, vector<16x1xf32> -> vector<16x2xf32>
    %c0_10 = arith.constant 0 : index
    %c0_11 = arith.constant 0 : index
    %23 = vector.load %arg6[%c0_10, %c0_11] : memref<16x16xf32, #tpu.memory_space<vmem>>, vector<16x16xf32>
    %cst_12 = arith.constant dense<0.000000e+00> : vector<16x2xf32>
    %24 = tpu.matmul %23, %22, %cst_12 {dimension_numbers = #tpu.dot_dimension_numbers<[1], [0], [0], [1], [0, 0, 1, 1], [], []>, precision = #tpu.contract_precision<fp32>} : vector<16x16xf32>, vector<16x2xf32>, vector<16x2xf32> -> vector<16x2xf32>
    %c0_13 = arith.constant 0 : index
    %c0_14 = arith.constant 0 : index
    %25 = vector.load %arg7[%c0_13, %c0_14] : memref<1x2xf32, #tpu.memory_space<vmem>>, vector<1x2xf32>
    %26 = vector.broadcast %25 : vector<1x2xf32> to vector<16x2xf32>
    %27 = arith.addf %24, %26 : vector<16x2xf32>
    %cst_15 = arith.constant dense<0.000000e+00> : vector<2xf32>
    %28 = vector.multi_reduction <add>, %22, %cst_15 [0] : vector<16x2xf32> to vector<2xf32>
    %29 = vector.shape_cast %28 : vector<2xf32> to vector<1x2xf32>
    %30 = arith.addf %25, %29 : vector<1x2xf32>
    %c0_16 = arith.constant 0 : index
    %c0_17 = arith.constant 0 : index
    %31 = vector.load %arg7[%c0_16, %c0_17] : memref<1x2xf32, #tpu.memory_space<vmem>>, vector<1x2xf32>
    tpu.vector_store %arg7[%c0_16, %c0_17], %30 {strides = array<i32>} : memref<1x2xf32, #tpu.memory_space<vmem>>, vector<1x2xf32>,
    %32 = vector.extract_strided_slice %27 {offsets = [0, 0], sizes = [16, 1], strides = [1, 1]} : vector<16x2xf32> to vector<16x1xf32>
    %33 = vector.extract_strided_slice %27 {offsets = [0, 1], sizes = [16, 1], strides = [1, 1]} : vector<16x2xf32> to vector<16x1xf32>
    %34 = arith.sitofp %15 : vector<16x1xi32> to vector<16x1xf32>
    %cst_18 = arith.constant 1.000000e+00 : f32
    %35 = vector.broadcast %cst_18 : f32 to vector<16x1xf32>
    %36 = arith.addf %34, %35 : vector<16x1xf32>
    %cst_19 = arith.constant 6.400000e+01 : f32
    %37 = vector.broadcast %cst_19 : f32 to vector<16x1xf32>
    %38 = arith.mulf %36, %37 : vector<16x1xf32>
    %cst_20 = arith.constant 1.000000e+00 : f32
    %39 = vector.broadcast %cst_20 : f32 to vector<16x1xf32>
    %40 = arith.divf %39, %38 : vector<16x1xf32>
    %41 = arith.mulf %32, %40 : vector<16x1xf32>
    %cst_21 = arith.constant 2.000000e+00 : f32
    %42 = vector.broadcast %cst_21 : f32 to vector<16x1xf32>
    %43 = arith.mulf %42, %41 : vector<16x1xf32>
    %44 = arith.mulf %43, %32 : vector<16x1xf32>
    %45 = arith.subf %33, %44 : vector<16x1xf32>
    %46 = arith.mulf %45, %40 : vector<16x1xf32>
    %47 = arith.mulf %41, %41 : vector<16x1xf32>
    %48 = arith.addf %46, %47 : vector<16x1xf32>
    %cst_22 = arith.constant 9.99999974E-6 : f32
    %49 = vector.broadcast %cst_22 : f32 to vector<16x1xf32>
    %50 = arith.addf %48, %49 : vector<16x1xf32>
    %51 = math.rsqrt %50 : vector<16x1xf32>
    %c0_23 = arith.constant 0 : index
    %c0_24 = arith.constant 0 : index
    %c0_25 = arith.constant 0 : index
    %52 = vector.load %arg3[%c0_23, %c0_24, %c0_25] : memref<4x1x16xf32, #tpu.memory_space<vmem>>, vector<4x1x16xf32>
    %c0_26 = arith.constant 0 : index
    %c0_27 = arith.constant 0 : index
    %c0_28 = arith.constant 0 : index
    %53 = vector.load %arg4[%c0_26, %c0_27, %c0_28] : memref<4x1x16xf32, #tpu.memory_space<vmem>>, vector<4x1x16xf32>
    %54 = vector.shape_cast %41 : vector<16x1xf32> to vector<1x16x1xf32>
    %55 = vector.shape_cast %51 : vector<16x1xf32> to vector<1x16x1xf32>
    %56 = vector.broadcast %54 : vector<1x16x1xf32> to vector<4x16x16xf32>
    %57 = arith.subf %4, %56 : vector<4x16x16xf32>
    %58 = vector.broadcast %55 : vector<1x16x1xf32> to vector<4x16x16xf32>
    %59 = arith.mulf %57, %58 : vector<4x16x16xf32>
    %60 = vector.broadcast %52 : vector<4x1x16xf32> to vector<4x16x16xf32>
    %61 = arith.mulf %59, %60 : vector<4x16x16xf32>
    %62 = vector.broadcast %53 : vector<4x1x16xf32> to vector<4x16x16xf32>
    %63 = arith.addf %61, %62 : vector<4x16x16xf32>
    %c0_29 = arith.constant 0 : index
    %c0_30 = arith.constant 0 : index
    %c0_31 = arith.constant 0 : index
    %c0_32 = arith.constant 0 : index
    %64 = vector.load %arg5[%c0_29, %c0_30, %c0_31, %c0_32] : memref<1x4x16x16xf32, #tpu.memory_space<vmem>>, vector<1x4x16x16xf32>
    %65 = vector.shape_cast %64 : vector<1x4x16x16xf32> to vector<4x16x16xf32>
    %66 = vector.shape_cast %63 : vector<4x16x16xf32> to vector<1x4x16x16xf32>
    tpu.vector_store %arg5[%c0_29, %c0_30, %c0_31, %c0_32], %66 {strides = array<i32>} : memref<1x4x16x16xf32, #tpu.memory_space<vmem>>, vector<1x4x16x16xf32>,
    return
  }
  func.func @transform_0(%arg0: i32, %arg1: i32) -> (i32, i32, i32, i32) {
    %c0_i32 = arith.constant 0 : i32
    %c0_i32_0 = arith.constant 0 : i32
    %c0_i32_1 = arith.constant 0 : i32
    return %arg0, %c0_i32, %arg1, %c0_i32_0 : i32, i32, i32, i32
  }
  func.func @transform_1(%arg0: i32, %arg1: i32) -> (i32, i32, i32) {
    %c0_i32 = arith.constant 0 : i32
    %c0_i32_0 = arith.constant 0 : i32
    %c0_i32_1 = arith.constant 0 : i32
    %c0_i32_2 = arith.constant 0 : i32
    return %c0_i32, %c0_i32_0, %c0_i32_1 : i32, i32, i32
  }
  func.func @transform_2(%arg0: i32, %arg1: i32) -> (i32, i32, i32) {
    %c0_i32 = arith.constant 0 : i32
    %c0_i32_0 = arith.constant 0 : i32
    %c0_i32_1 = arith.constant 0 : i32
    %c0_i32_2 = arith.constant 0 : i32
    return %c0_i32, %c0_i32_0, %c0_i32_1 : i32, i32, i32
  }
  func.func @transform_3(%arg0: i32, %arg1: i32) -> (i32, i32, i32, i32) {
    %c0_i32 = arith.constant 0 : i32
    %c0_i32_0 = arith.constant 0 : i32
    %c0_i32_1 = arith.constant 0 : i32
    return %arg0, %c0_i32, %arg1, %c0_i32_0 : i32, i32, i32, i32
  }
}

</mosaic_0001>

<llo_original>
// kernel: tpu_custom_call.1
$region0: #{tpu_custom_call.1}
  #allocation0 [shape = 'u32[]', space=smem, size = 0x4, offset = 0x4, fixed_abs, tag = 'smem constant byte address 0x4 - core index']
  #allocation1 [shape = 'u32[72,128]{1,0:T(1,128)}', space=vmem, size = 0x9000, scoped, tag = 'internal scratch']
  #allocation2 [shape = 'f32[16,16]{1,0:T(8,128)}', space=vmem, size = 0x2000, scoped, tag = 'scratch operand']
  #allocation3 [shape = 'f32[1,2]{1,0:T(1,128)}', space=vmem, size = 0x200, scoped, tag = 'scratch operand']
  %s0 = inlined_call_operand.hbm [shape: f32[2,4,16,16], index: 0, kind: input, shape index: {}]
  %s1 = inlined_call_operand.hbm [shape: f32[4,1,16], index: 1, kind: input, shape index: {}]
  %s2 = inlined_call_operand.hbm [shape: f32[4,1,16], index: 2, kind: input, shape index: {}]
  %s3 = inlined_call_operand.hbm [shape: f32[2,4,16,16], index: 3, kind: output, shape index: {}]
  %s4 = sld [smem:[#allocation0]]
  $region61: #{tpu_custom_call.1} parent=0
    _
  %s6 = ssub.s32 1, %s4
  %s7 = scalar_select 0, %s6, %s4
  $region1: #{tpu_custom_call.1} parent=0
    #allocation4 [shape = 'u8[65536]{0}', space=vmem, size = 0x10000, scoped, tag = 'input window, operand 0']
    #allocation5 [shape = 's32[2]{0}', space=sflag, size = 0x8, scoped, tag = 'scoped memory for tpu_custom_call.1']
    #allocation6 [shape = 's32[2]{0}', space=sflag, size = 0x8, scoped, tag = 'scoped memory for tpu_custom_call.1']
    #allocation7 [shape = 'u8[2048]{0}', space=vmem, size = 0x800, scoped, tag = 'input window, operand 1, single buffered']
    #allocation8 [shape = 's32[1]{0}', space=sflag, size = 0x4, scoped, tag = 'scoped memory for tpu_custom_call.1']
    #allocation9 [shape = 'u8[2048]{0}', space=vmem, size = 0x800, scoped, tag = 'input window, operand 2, single buffered']
    #allocation10 [shape = 'u8[65536]{0}', space=vmem, size = 0x10000, scoped, tag = 'output window, operand 0']
    %8 = vsyncpa [#allocation5], 0
    %s9 = scalar_lea.sflag [#allocation5], 1
    %10 = vsyncpa %s9, 0
    %11 = vsyncpa [#allocation8], 0
    %12 = vsyncpa [#allocation6], 0
    %s13 = scalar_lea.sflag [#allocation6], 1
    %14 = vsyncpa %s13, 0
    loop: start=0, step=1, limit=4
    $region2: #{tpu_custom_call.1} parent=1 // loop_pre_header
      _
    $region3: #{tpu_custom_call.1} parent=1 // loop_header
      %s16 = sphi 0, %s20
      %p17 = scmp.ge.s32.totalorder %s16, 4
      %s23 = sphi 0, %s35
      %s24 = sphi 0, %s31
      %s25 = sphi 0, %s23
      %s26 = sphi 0, %s24
      %s27 = sphi 0, %s25
      %s28 = sphi 0, %s26
      %s40 = sphi 0, %s42
      %s43 = sphi 0, %s40
      %s44 = sphi 0, %s43
      %s60 = sphi 0, %s44
      %s64 = sphi 0, %s64
      %s66 = sphi 0, %s64
      %s67 = sphi 0, %s66
      %s81 = sphi 0, %s67
      %s85 = sphi 0, %s85
      %s87 = sphi 0, %s85
      %s88 = sphi 0, %s87
      %s102 = sphi 0, %s88
      %s110 = sphi 0, %s112
      %s113 = sphi 0, %s110
      %s114 = sphi 0, %s113
      %s130 = sphi 0, %s114
    $region4: #{tpu_custom_call.1} parent=1 // loop_header_branch
      %19 = sbr.rel (%p17) target = $region8
    $region5: #{tpu_custom_call.1} parent=1 // loop_body
      %s21 = ssub.s32 %s16, 1
      %s22 = ssub.s32 %s16, 2
      %s29 = sadd.s32 1, %s24
      %p30 = scmp.ge.s32.totalorder %s29, 1
      %s31 = scalar_select %p30, 0, %s29
      %s32 = sadd.s32 1, %s23
      %s33 = scalar_select %p30, %s32, %s23
      %p34 = scmp.ge.s32.totalorder %s33, 2
      %s35 = scalar_select %p34, 0, %s33
      %s36 = ssub.s32 %s23, %s35
      %s37 = ssub.s32 %s24, %s31
      %s38 = sor.u32 %s36, %s37
      %p39 = scmp.eq.s32.totalorder %s38, 0
      %s41 = sadd.s32 %s40, 1
      %s42 = scalar_select %p39, %s40, %s41
      %p45 = pneg %p39
      %p46 = scmp.eq.s32.totalorder %s16, 1
      %p47 = por %p45, %p46
      %p48 = scmp.ne.s32.totalorder %s40, %s43
      %p49 = scmp.eq.s32.totalorder %s16, 0
      %p50 = por %p48, %p49
      %p51 = scmp.ne.s32.totalorder %s40, %s43
      %p52 = scmp.eq.s32.totalorder %s21, 1
      %p53 = por %p51, %p52
      %p54 = scmp.ne.s32.totalorder %s43, %s44
      %p55 = scmp.eq.s32.totalorder %s21, 0
      %p56 = por %p54, %p55
      %p57 = scmp.ne.s32.totalorder %s43, %s44
      %p58 = scmp.eq.s32.totalorder %s22, 1
      %p59 = por %p57, %p58
      %p61 = scmp.ne.s32.totalorder %s44, %s60
      %p62 = scmp.eq.s32.totalorder %s22, 0
      %p63 = por %p61, %p62
      %s65 = sadd.s32 %s64, 1
      %p68 = scmp.eq.s32.totalorder %s16, 1
      %p69 = scmp.ne.s32.totalorder %s64, %s66
      %p70 = scmp.eq.s32.totalorder %s16, 0
      %p71 = por %p69, %p70
      %p72 = scmp.ne.s32.totalorder %s64, %s66
      %p73 = scmp.eq.s32.totalorder %s21, 1
      %p74 = por %p72, %p73
      %p75 = scmp.ne.s32.totalorder %s66, %s67
      %p76 = scmp.eq.s32.totalorder %s21, 0
      %p77 = por %p75, %p76
      %p78 = scmp.ne.s32.totalorder %s66, %s67
      %p79 = scmp.eq.s32.totalorder %s22, 1
      %p80 = por %p78, %p79
      %p82 = scmp.ne.s32.totalorder %s67, %s81
      %p83 = scmp.eq.s32.totalorder %s22, 0
      %p84 = por %p82, %p83
      %s86 = sadd.s32 %s85, 1
      %p89 = scmp.eq.s32.totalorder %s16, 1
      %p90 = scmp.ne.s32.totalorder %s85, %s87
      %p91 = scmp.eq.s32.totalorder %s16, 0
      %p92 = por %p90, %p91
      %p93 = scmp.ne.s32.totalorder %s85, %s87
      %p94 = scmp.eq.s32.totalorder %s21, 1
      %p95 = por %p93, %p94
      %p96 = scmp.ne.s32.totalorder %s87, %s88
      %p97 = scmp.eq.s32.totalorder %s21, 0
      %p98 = por %p96, %p97
      %p99 = scmp.ne.s32.totalorder %s87, %s88
      %p100 = scmp.eq.s32.totalorder %s22, 1
      %p101 = por %p99, %p100
      %p103 = scmp.ne.s32.totalorder %s88, %s102
      %p104 = scmp.eq.s32.totalorder %s22, 0
      %p105 = por %p103, %p104
      %s106 = ssub.s32 %s23, %s35
      %s107 = ssub.s32 %s24, %s31
      %s108 = sor.u32 %s106, %s107
      %p109 = scmp.eq.s32.totalorder %s108, 0
      %s111 = sadd.s32 %s110, 1
      %s112 = scalar_select %p109, %s110, %s111
      %p115 = pneg %p109
      %p116 = scmp.eq.s32.totalorder %s16, 1
      %p117 = por %p115, %p116
      %p118 = scmp.ne.s32.totalorder %s110, %s113
      %p119 = scmp.eq.s32.totalorder %s16, 0
      %p120 = por %p118, %p119
      %p121 = scmp.ne.s32.totalorder %s110, %s113
      %p122 = scmp.eq.s32.totalorder %s21, 1
      %p123 = por %p121, %p122
      %p124 = scmp.ne.s32.totalorder %s113, %s114
      %p125 = scmp.eq.s32.totalorder %s21, 0
      %p126 = por %p124, %p125
      %p127 = scmp.ne.s32.totalorder %s113, %s114
      %p128 = scmp.eq.s32.totalorder %s22, 1
      %p129 = por %p127, %p128
      %p131 = scmp.ne.s32.totalorder %s114, %s130
      %p132 = scmp.eq.s32.totalorder %s22, 0
      %p133 = por %p131, %p132
      %p134 = scmp.le.s32.totalorder 1, %s16
      %p135 = scmp.lt.s32.totalorder %s16, 3
      %p136 = pnand %p134, %p135
      %p137 = pneg %p136
      // Predicated region
      $region9: #{tpu_custom_call.1} parent=5 // pred_check
        _
      $region10: #{tpu_custom_call.1} parent=5 // pred_check_branch
        %139 = sbr.rel (%p136) target = $region12
      $region11: #{tpu_custom_call.1} parent=5 // pred_region
        %s140 = ssub.s32 %s16, 1
        // Predicated region
        $region13: #{tpu_custom_call.1} parent=11 // pred_check
          %p141 = pneg %p77
        $region14: #{tpu_custom_call.1} parent=11 // pred_check_branch
          %143 = sbr.rel (%p141) target = $region16
        $region15: #{tpu_custom_call.1} parent=11 // pred_region
          %145 = vsyncadd [#allocation8], 0
          %s146 = sshll.u32 %s1, 4
          %s147 = int_to_ptr.hbm [resolvable:$true] %s146
          %s148 = sshll.u32 [#allocation7], 4
          %s149 = int_to_ptr.vmem [resolvable:$true] %s148
          %154 = dma.hbm_to_vmem [thread:$0]  %s147, 64, %s149, [#allocation8], 16, 16, 1
        $region16: #{tpu_custom_call.1} parent=11 // pred_fallthru
          _
        // Predicated region
        $region17: #{tpu_custom_call.1} parent=11 // pred_check
          %p155 = pneg %p98
        $region18: #{tpu_custom_call.1} parent=11 // pred_check_branch
          %157 = sbr.rel (%p155) target = $region20
        $region19: #{tpu_custom_call.1} parent=11 // pred_region
          %159 = vsyncadd [#allocation8], 0
          %s160 = sshll.u32 %s2, 4
          %s161 = int_to_ptr.hbm [resolvable:$true] %s160
          %s162 = sshll.u32 [#allocation9], 4
          %s163 = int_to_ptr.vmem [resolvable:$true] %s162
          %168 = dma.hbm_to_vmem [thread:$0]  %s161, 64, %s163, [#allocation8], 16, 16, 1
        $region20: #{tpu_custom_call.1} parent=11 // pred_fallthru
          _
      $region12: #{tpu_custom_call.1} parent=5 // pred_fallthru
        _
      %p169 = scmp.lt.s32.totalorder %s16, 2
      // Predicated region
      $region21: #{tpu_custom_call.1} parent=5 // pred_check
        %p170 = pneg %p169
      $region22: #{tpu_custom_call.1} parent=5 // pred_check_branch
        %172 = sbr.rel (%p170) target = $region24
      $region23: #{tpu_custom_call.1} parent=5 // pred_region
        // Predicated region
        $region25: #{tpu_custom_call.1} parent=23 // pred_check
          %p173 = pneg %p50
        $region26: #{tpu_custom_call.1} parent=23 // pred_check_branch
          %175 = sbr.rel (%p173) target = $region28
        $region27: #{tpu_custom_call.1} parent=23 // pred_region
          %s176 = sand.u32 %s40, 1
          %s177 = scalar_lea.sflag [#allocation5], %s176
          %s178 = sand.u32 %s40, 1
          %s179 = smul.addr %s178, 64
          %s180 = scalar_lea.vmem [#allocation4], %s179
          %s181 = smul.u32 2, %s24
          %183 = vsyncadd %s177, 0
          %s184 = smul.addr %s23, 8
          %s185 = sadd.s32 %s181, %s184
          %s186 = smul.addr %s185, 8
          %s187 = scalar_lea.hbm %s0, %s186
          %s188 = sshll.u32 %s187, 4
          %s189 = int_to_ptr.hbm [resolvable:$true] %s188
          %s190 = sshll.u32 %s180, 4
          %s191 = int_to_ptr.vmem [resolvable:$true] %s190
          %196 = dma.hbm_to_vmem [thread:$0]  %s189, 1024, %s191, %s177, 128, 128, 8
        $region28: #{tpu_custom_call.1} parent=23 // pred_fallthru
          _
      $region24: #{tpu_custom_call.1} parent=5 // pred_fallthru
        _
      %p197 = scmp.le.s32.totalorder 1, %s16
      %p198 = scmp.lt.s32.totalorder %s16, 3
      %p199 = pnand %p197, %p198
      %p200 = pneg %p199
      // Predicated region
      $region29: #{tpu_custom_call.1} parent=5 // pred_check
        _
      $region30: #{tpu_custom_call.1} parent=5 // pred_check_branch
        %202 = sbr.rel (%p199) target = $region32
      $region31: #{tpu_custom_call.1} parent=5 // pred_region
        %s203 = ssub.s32 %s16, 1
        %s204 = sand.u32 %s43, 1
        %s205 = scalar_lea.sflag [#allocation5], %s204
        %s206 = sand.u32 %s43, 1
        %s207 = smul.addr %s206, 64
        %s208 = scalar_lea.vmem [#allocation4], %s207
        // Predicated region
        $region33: #{tpu_custom_call.1} parent=31 // pred_check
          %p209 = pneg %p56
        $region34: #{tpu_custom_call.1} parent=31 // pred_check_branch
          %211 = sbr.rel (%p209) target = $region36
        $region35: #{tpu_custom_call.1} parent=31 // pred_region
          %213 = dma.done %s205, 1024
        $region36: #{tpu_custom_call.1} parent=31 // pred_fallthru
          _
        // Predicated region
        $region37: #{tpu_custom_call.1} parent=31 // pred_check
          %p214 = pneg %p77
        $region38: #{tpu_custom_call.1} parent=31 // pred_check_branch
          %216 = sbr.rel (%p214) target = $region40
        $region39: #{tpu_custom_call.1} parent=31 // pred_region
          %218 = dma.done [#allocation8], 64
        $region40: #{tpu_custom_call.1} parent=31 // pred_fallthru
          _
        // Predicated region
        $region41: #{tpu_custom_call.1} parent=31 // pred_check
          %p219 = pneg %p98
        $region42: #{tpu_custom_call.1} parent=31 // pred_check_branch
          %221 = sbr.rel (%p219) target = $region44
        $region43: #{tpu_custom_call.1} parent=31 // pred_region
          %223 = dma.done [#allocation8], 64
        $region44: #{tpu_custom_call.1} parent=31 // pred_fallthru
          _
        %s224 = sand.u32 %s43, 1
        %s225 = scalar_lea.sflag [#allocation5], %s224
        %s226 = sand.u32 %s43, 1
        %s227 = smul.addr %s226, 64
        %s228 = scalar_lea.vmem [#allocation4], %s227
        %p229 = pneg %p56
        %p230 = pneg %p53
        %p231 = pneg %p77
        %p232 = pneg %p74
        %p233 = pneg %p98
        %p234 = pneg %p95
        %p235 = pneg %p126
        %p236 = pneg %p123
        %s237 = sand.u32 %s113, 1
        %s238 = scalar_lea.sflag [#allocation6], %s237
        %s239 = sand.u32 %s113, 1
        %s240 = smul.addr %s239, 64
        %s241 = scalar_lea.vmem [#allocation10], %s240
        %s242 = smul.u32 2, %s26
        %s243 = smul.u32 2, %s26
        %p244 = scmp.eq.s32.totalorder %s26, 0
        // Predicated region
        $region45: #{tpu_custom_call.1} parent=31 // pred_check
          %p245 = pneg %p244
        $region46: #{tpu_custom_call.1} parent=31 // pred_check_branch
          %247 = sbr.rel (%p245) target = $region48
        $region47: #{tpu_custom_call.1} parent=31 // pred_region
          %vm248 = vcmask 8192
          %249 = vst.msk [vmem:[#allocation3] sm:$0x1] %vm248, 0.0
          %v250 = vlaneseq
          %v251 = vshrl.u32 %v250, 7
          %v252 = vadd.s32 %v251, 8
          %v253 = vlaneseq
          %v254 = vand.u32 %v253, 127
          %vm255 = vcmp.ge.s32.totalorder %v251, %v254
          %vm256 = vcmp.ge.s32.totalorder %v252, %v254
          %v257 = vsel %vm255, 1, 0
          %v258 = vsel %vm256, 1, 0
          %v259 = vcvt.s32.f32 %v257
          %v260 = vcvt.s32.f32 %v258
          %vm261 = vcmask 130048
          %262 = vst.msk [vmem:[#allocation2] sm:$0xff] %vm261, %v259
          %263 = vst.msk [vmem:[#allocation2 + $0x8] sm:$0xff] %vm261, %v260
        $region48: #{tpu_custom_call.1} parent=31 // pred_fallthru
          _
        %v264 = vld [vmem:[%s208] sm:$0xff]
        %v265 = vld [vmem:[%s208 + $0x8] sm:$0xff]
        %v266 = vld [vmem:[%s208 + $0x10] sm:$0xff]
        %v267 = vld [vmem:[%s208 + $0x18] sm:$0xff]
        %v268 = vld [vmem:[%s208 + $0x20] sm:$0xff]
        %v269 = vld [vmem:[%s208 + $0x28] sm:$0xff]
        %v270 = vld [vmem:[%s208 + $0x30] sm:$0xff]
        %v271 = vld [vmem:[%s208 + $0x38] sm:$0xff]
        %vm272 = vcmask 130048
        %v273 = vsel %vm272, %v264, 0.0
        %274 = vadd.xlane.f32.xlu0 %v273
        %v275 = vpop.xlane.xlu0 %274
        %v276 = vsel %vm272, %v265, 0.0
        %277 = vadd.xlane.f32.xlu0 %v276
        %v278 = vpop.xlane.xlu0 %277
        %v279 = vsel %vm272, %v266, 0.0
        %280 = vadd.xlane.f32.xlu0 %v279
        %v281 = vpop.xlane.xlu0 %280
        %v282 = vsel %vm272, %v267, 0.0
        %283 = vadd.xlane.f32.xlu0 %v282
        %v284 = vpop.xlane.xlu0 %283
        %v285 = vsel %vm272, %v268, 0.0
        %286 = vadd.xlane.f32.xlu0 %v285
        %v287 = vpop.xlane.xlu0 %286
        %v288 = vsel %vm272, %v269, 0.0
        %289 = vadd.xlane.f32.xlu0 %v288
        %v290 = vpop.xlane.xlu0 %289
        %v291 = vsel %vm272, %v270, 0.0
        %292 = vadd.xlane.f32.xlu0 %v291
        %v293 = vpop.xlane.xlu0 %292
        %v294 = vsel %vm272, %v271, 0.0
        %295 = vadd.xlane.f32.xlu0 %v294
        %v296 = vpop.xlane.xlu0 %295
        %v297 = vmul.f32 %v264, %v264
        %v298 = vmul.f32 %v265, %v265
        %v299 = vmul.f32 %v266, %v266
        %v300 = vmul.f32 %v267, %v267
        %v301 = vmul.f32 %v268, %v268
        %v302 = vmul.f32 %v269, %v269
        %v303 = vmul.f32 %v270, %v270
        %v304 = vmul.f32 %v271, %v271
        %v305 = vsel %vm272, %v297, 0.0
        %306 = vadd.xlane.f32.xlu0 %v305
        %v307 = vpop.xlane.xlu0 %306
        %v308 = vsel %vm272, %v298, 0.0
        %309 = vadd.xlane.f32.xlu0 %v308
        %v310 = vpop.xlane.xlu0 %309
        %v311 = vsel %vm272, %v299, 0.0
        %312 = vadd.xlane.f32.xlu0 %v311
        %v313 = vpop.xlane.xlu0 %312
        %v314 = vsel %vm272, %v300, 0.0
        %315 = vadd.xlane.f32.xlu0 %v314
        %v316 = vpop.xlane.xlu0 %315
        %v317 = vsel %vm272, %v301, 0.0
        %318 = vadd.xlane.f32.xlu0 %v317
        %v319 = vpop.xlane.xlu0 %318
        %v320 = vsel %vm272, %v302, 0.0
        %321 = vadd.xlane.f32.xlu0 %v320
        %v322 = vpop.xlane.xlu0 %321
        %v323 = vsel %vm272, %v303, 0.0
        %324 = vadd.xlane.f32.xlu0 %v323
        %v325 = vpop.xlane.xlu0 %324
        %v326 = vsel %vm272, %v304, 0.0
        %327 = vadd.xlane.f32.xlu0 %v326
        %v328 = vpop.xlane.xlu0 %327
        %v329 = vadd.f32 %v275, %v281
        %v330 = vadd.f32 %v329, %v287
        %v331 = vadd.f32 %v330, %v293
        %v332 = vadd.f32 %v278, %v284
        %v333 = vadd.f32 %v332, %v290
        %v334 = vadd.f32 %v333, %v296
        %v335 = vadd.f32 %v307, %v313
        %v336 = vadd.f32 %v335, %v319
        %v337 = vadd.f32 %v336, %v325
        %v338 = vadd.f32 %v310, %v316
        %v339 = vadd.f32 %v338, %v322
        %v340 = vadd.f32 %v339, %v328
        %v341 = vlaneseq
        %v342 = vshrl.u32 %v341, 7
        %v343 = vadd.s32 %v342, 8
        %s344 = smul.u32 %s26, 16
        %v345 = vstv %s344
        %v346 = vadd.s32 %v345, %v342
        %v347 = vadd.s32 %v345, %v343
        %vm348 = vcmp.lt.s32.totalorder %v346, 16
        %vm349 = vcmp.lt.s32.totalorder %v347, 16
        %v350 = vsel %vm348, %v331, 0.0
        %v351 = vsel %vm349, %v334, 0.0
        %v352 = vsel %vm348, %v337, 0.0
        %v353 = vsel %vm349, %v340, 0.0
        %vm354 = vcmask 7168
        %v355 = vsel %vm354, %v350, %v352
        %v356 = vsel %vm354, %v351, %v353
        %v357 = vld [vmem:[#allocation2] sm:$0xff]
        %v358 = vld [vmem:[#allocation2 + $0x8] sm:$0xff]
        %v359 = vld [vmem:[#allocation3] sm:$0x1]
        %v361 = vperm.slane %v359, 0
        %v364 = vsel %vm272, %v357, 0
        %v367 = vsel %vm272, %v358, 0
        %369 = vmatpush.msra.mxu0 0.0
        %370 = vmatpush.msra.mxu0 0.0
        %371 = vmatpush.msra.mxu0 0.0
        %372 = vmatpush.msra.mxu0 0.0
        %373 = vmatpush.msra.mxu0 0.0
        %374 = vmatpush.msra.mxu0 0.0
        %375 = vmatpush.msra.mxu0 0.0
        %376 = vmatpush.msra.mxu0 0.0
        %377 = vmatpush.msra.mxu0 0.0
        %378 = vmatpush.msra.mxu0 0.0
        %379 = vmatpush.msra.mxu0 0.0
        %380 = vmatpush.msra.mxu0 0.0
        %381 = vmatpush.msra.mxu0 0.0
        %382 = vmatpush.msra.mxu0 0.0
        %v383 = vand.u32 %v356, 4294901760
        %384 = vmatpush.msra.mxu0 %v383
        %v385 = vand.u32 %v355, 4294901760
        %386 = vmatpush.msra.mxu0 %v385
        %v387 = vand.u32 %v364, 4294901760
        %v388 = vsub.f32 %v364, %v387
        %v389 = vand.u32 %v388, 4294901760
        %v390 = vsub.f32 %v388, %v389
        %v391 = vand.u32 %v390, 4294901760
        %392 = vmatmul.f32.gmra.mxu0 %v391
        %v393 = vpop.f32.mrf.mxu0
        %v394 = vadd.f32 %v361, %v393
        %v395 = vand.u32 %v367, 4294901760
        %v396 = vsub.f32 %v367, %v395
        %v397 = vand.u32 %v396, 4294901760
        %v398 = vsub.f32 %v396, %v397
        %v399 = vand.u32 %v398, 4294901760
        %400 = vmatmul.f32.gmra.mxu0 %v399
        %v401 = vpop.f32.mrf.mxu0
        %v402 = vadd.f32 %v361, %v401
        %403 = vdwg.mxu0
        %404 = vmatpush.msra.mxu0 0.0
        %405 = vmatpush.msra.mxu0 0.0
        %406 = vmatpush.msra.mxu0 0.0
        %407 = vmatpush.msra.mxu0 0.0
        %408 = vmatpush.msra.mxu0 0.0
        %409 = vmatpush.msra.mxu0 0.0
        %410 = vmatpush.msra.mxu0 0.0
        %411 = vmatpush.msra.mxu0 0.0
        %412 = vmatpush.msra.mxu0 0.0
        %413 = vmatpush.msra.mxu0 0.0
        %414 = vmatpush.msra.mxu0 0.0
        %415 = vmatpush.msra.mxu0 0.0
        %416 = vmatpush.msra.mxu0 0.0
        %417 = vmatpush.msra.mxu0 0.0
        %v418 = vand.u32 %v356, 4294901760
        %v419 = vsub.f32 %v356, %v418
        %v420 = vand.u32 %v419, 4294901760
        %v421 = vsub.f32 %v419, %v420
        %v422 = vand.u32 %v421, 4294901760
        %423 = vmatpush.msra.mxu0 %v422
        %v424 = vand.u32 %v355, 4294901760
        %v425 = vsub.f32 %v355, %v424
        %v426 = vand.u32 %v425, 4294901760
        %v427 = vsub.f32 %v425, %v426
        %v428 = vand.u32 %v427, 4294901760
        %429 = vmatpush.msra.mxu0 %v428
        %v430 = vand.u32 %v364, 4294901760
        %431 = vmatmul.f32.gmra.mxu0 %v430
        %v432 = vpop.f32.mrf.mxu0
        %v433 = vadd.f32 %v394, %v432
        %v434 = vand.u32 %v367, 4294901760
        %435 = vmatmul.f32.gmra.mxu0 %v434
        %v436 = vpop.f32.mrf.mxu0
        %v437 = vadd.f32 %v402, %v436
        %438 = vdwg.mxu0
        %439 = vmatpush.msra.mxu0 0.0
        %440 = vmatpush.msra.mxu0 0.0
        %441 = vmatpush.msra.mxu0 0.0
        %442 = vmatpush.msra.mxu0 0.0
        %443 = vmatpush.msra.mxu0 0.0
        %444 = vmatpush.msra.mxu0 0.0
        %445 = vmatpush.msra.mxu0 0.0
        %446 = vmatpush.msra.mxu0 0.0
        %447 = vmatpush.msra.mxu0 0.0
        %448 = vmatpush.msra.mxu0 0.0
        %449 = vmatpush.msra.mxu0 0.0
        %450 = vmatpush.msra.mxu0 0.0
        %451 = vmatpush.msra.mxu0 0.0
        %452 = vmatpush.msra.mxu0 0.0
        %v453 = vand.u32 %v356, 4294901760
        %v454 = vsub.f32 %v356, %v453
        %455 = vmatpush.msra.mxu0 %v454
        %v456 = vand.u32 %v355, 4294901760
        %v457 = vsub.f32 %v355, %v456
        %458 = vmatpush.msra.mxu0 %v457
        %v459 = vand.u32 %v364, 4294901760
        %v460 = vsub.f32 %v364, %v459
        %461 = vmatmul.f32.gmra.mxu0 %v460
        %v462 = vpop.f32.mrf.mxu0
        %v463 = vadd.f32 %v433, %v462
        %v464 = vand.u32 %v367, 4294901760
        %v465 = vsub.f32 %v367, %v464
        %466 = vmatmul.f32.gmra.mxu0 %v465
        %v467 = vpop.f32.mrf.mxu0
        %v468 = vadd.f32 %v437, %v467
        %469 = vdwg.mxu0
        %470 = vmatpush.msra.mxu0 0.0
        %471 = vmatpush.msra.mxu0 0.0
        %472 = vmatpush.msra.mxu0 0.0
        %473 = vmatpush.msra.mxu0 0.0
        %474 = vmatpush.msra.mxu0 0.0
        %475 = vmatpush.msra.mxu0 0.0
        %476 = vmatpush.msra.mxu0 0.0
        %477 = vmatpush.msra.mxu0 0.0
        %478 = vmatpush.msra.mxu0 0.0
        %479 = vmatpush.msra.mxu0 0.0
        %480 = vmatpush.msra.mxu0 0.0
        %481 = vmatpush.msra.mxu0 0.0
        %482 = vmatpush.msra.mxu0 0.0
        %483 = vmatpush.msra.mxu0 0.0
        %v484 = vand.u32 %v356, 4294901760
        %485 = vmatpush.msra.mxu0 %v484
        %v486 = vand.u32 %v355, 4294901760
        %487 = vmatpush.msra.mxu0 %v486
        %v488 = vand.u32 %v364, 4294901760
        %v489 = vsub.f32 %v364, %v488
        %v490 = vand.u32 %v489, 4294901760
        %491 = vmatmul.f32.gmra.mxu0 %v490
        %v492 = vpop.f32.mrf.mxu0
        %v493 = vadd.f32 %v463, %v492
        %v494 = vand.u32 %v367, 4294901760
        %v495 = vsub.f32 %v367, %v494
        %v496 = vand.u32 %v495, 4294901760
        %497 = vmatmul.f32.gmra.mxu0 %v496
        %v498 = vpop.f32.mrf.mxu0
        %v499 = vadd.f32 %v468, %v498
        %500 = vdwg.mxu0
        %501 = vmatpush.msra.mxu0 0.0
        %502 = vmatpush.msra.mxu0 0.0
        %503 = vmatpush.msra.mxu0 0.0
        %504 = vmatpush.msra.mxu0 0.0
        %505 = vmatpush.msra.mxu0 0.0
        %506 = vmatpush.msra.mxu0 0.0
        %507 = vmatpush.msra.mxu0 0.0
        %508 = vmatpush.msra.mxu0 0.0
        %509 = vmatpush.msra.mxu0 0.0
        %510 = vmatpush.msra.mxu0 0.0
        %511 = vmatpush.msra.mxu0 0.0
        %512 = vmatpush.msra.mxu0 0.0
        %513 = vmatpush.msra.mxu0 0.0
        %514 = vmatpush.msra.mxu0 0.0
        %v515 = vand.u32 %v356, 4294901760
        %v516 = vsub.f32 %v356, %v515
        %v517 = vand.u32 %v516, 4294901760
        %518 = vmatpush.msra.mxu0 %v517
        %v519 = vand.u32 %v355, 4294901760
        %v520 = vsub.f32 %v355, %v519
        %v521 = vand.u32 %v520, 4294901760
        %522 = vmatpush.msra.mxu0 %v521
        %v523 = vand.u32 %v364, 4294901760
        %524 = vmatmul.f32.gmra.mxu0 %v523
        %v525 = vpop.f32.mrf.mxu0
        %v526 = vadd.f32 %v493, %v525
        %v527 = vand.u32 %v367, 4294901760
        %528 = vmatmul.f32.gmra.mxu0 %v527
        %v529 = vpop.f32.mrf.mxu0
        %v530 = vadd.f32 %v499, %v529
        %531 = vdwg.mxu0
        %532 = vmatpush.msra.mxu0 0.0
        %533 = vmatpush.msra.mxu0 0.0
        %534 = vmatpush.msra.mxu0 0.0
        %535 = vmatpush.msra.mxu0 0.0
        %536 = vmatpush.msra.mxu0 0.0
        %537 = vmatpush.msra.mxu0 0.0
        %538 = vmatpush.msra.mxu0 0.0
        %539 = vmatpush.msra.mxu0 0.0
        %540 = vmatpush.msra.mxu0 0.0
        %541 = vmatpush.msra.mxu0 0.0
        %542 = vmatpush.msra.mxu0 0.0
        %543 = vmatpush.msra.mxu0 0.0
        %544 = vmatpush.msra.mxu0 0.0
        %545 = vmatpush.msra.mxu0 0.0
        %v546 = vand.u32 %v356, 4294901760
        %547 = vmatpush.msra.mxu0 %v546
        %v548 = vand.u32 %v355, 4294901760
        %549 = vmatpush.msra.mxu0 %v548
        %v550 = vand.u32 %v364, 4294901760
        %551 = vmatmul.f32.gmra.mxu0 %v550
        %v552 = vpop.f32.mrf.mxu0
        %v553 = vadd.f32 %v526, %v552
        %v554 = vand.u32 %v367, 4294901760
        %555 = vmatmul.f32.gmra.mxu0 %v554
        %v556 = vpop.f32.mrf.mxu0
        %v557 = vadd.f32 %v530, %v556
        %558 = vdwg.mxu0
        %vm559 = vcmask 15360
        %v560 = vsel %vm559, %v355, 0.0
        %v561 = vsel %vm559, %v356, 0.0
        %v562 = vadd.f32 %v560, %v561
        %v563 = vrot.slane %v562, 4
        %v564 = vadd.f32 %v562, %v563
        %v565 = vrot.slane %v564, 2
        %v566 = vadd.f32 %v564, %v565
        %v567 = vrot.slane %v566, 1
        %v568 = vadd.f32 %v566, %v567
        %v569 = vadd.f32 %v359, %v568
        %vm570 = vcmask 8192
        %571 = vst.msk [vmem:[#allocation3] sm:$0x1] %vm570, %v569
        %v572 = vcvt.s32.f32 %v346
        %v573 = vcvt.s32.f32 %v347
        %v574 = vadd.f32 %v572, 1.0
        %v575 = vadd.f32 %v573, 1.0
        %v576 = vmul.f32 %v574, 64.0
        %v577 = vmul.f32 %v575, 64.0
        %v578 = vrcp.pop %v576
        %v579 = vmul.f32 %v576, %v578
        %v580 = vsub.f32 1.0, %v579
        %v581 = vmul.f32 %v578, %v580
        %v582 = vadd.f32 %v578, %v581
        %vm583 = vweird.f32 %v576
        %vm584 = vweird.f32 %v578
        %vm585 = vmor %vm583, %vm584
        %v586 = vsel %vm585, %v578, %v582
        %v587 = vand.u32 2147483647, %v576
        %vm588 = vcmp.eq.f32.partialorder %v587, 8.507059e+37
        %v589 = vand.u32 %v576, 2147483648
        %v590 = vor.u32 1.1754944e-38, %v589
        %v591 = vsel %vm588, %v590, %v586
        %v592 = vmul.f32 1.0, %v591
        %v593 = vrcp.pop %v577
        %v594 = vmul.f32 %v577, %v593
        %v595 = vsub.f32 1.0, %v594
        %v596 = vmul.f32 %v593, %v595
        %v597 = vadd.f32 %v593, %v596
        %vm598 = vweird.f32 %v577
        %vm599 = vweird.f32 %v593
        %vm600 = vmor %vm598, %vm599
        %v601 = vsel %vm600, %v593, %v597
        %v602 = vand.u32 2147483647, %v577
        %vm603 = vcmp.eq.f32.partialorder %v602, 8.507059e+37
        %v604 = vand.u32 %v577, 2147483648
        %v605 = vor.u32 1.1754944e-38, %v604
        %v606 = vsel %vm603, %v605, %v601
        %v607 = vmul.f32 1.0, %v606
        %v608 = vmul.f32 %v553, %v592
        %v609 = vmul.f32 %v557, %v607
        %v610 = vmul.f32 %v608, 2.0
        %v611 = vmul.f32 %v609, 2.0
        %v612 = vmul.f32 %v610, %v553
        %v613 = vmul.f32 %v611, %v557
        %616 = vrot.lane.b32.xlu0 %v612, 1
        %v617 = vpop.permute.xlu0 %616
        %618 = vrot.lane.b32.xlu0 %v613, 1
        %v619 = vpop.permute.xlu0 %618
        %v622 = vsub.f32 %v553, %v617
        %v623 = vsub.f32 %v557, %v619
        %v624 = vmul.f32 %v622, %v592
        %v625 = vmul.f32 %v623, %v607
        %v626 = vmul.f32 %v608, %v608
        %v627 = vmul.f32 %v609, %v609
        %630 = vrot.lane.b32.xlu0 %v626, 1
        %v631 = vpop.permute.xlu0 %630
        %632 = vrot.lane.b32.xlu0 %v627, 1
        %v633 = vpop.permute.xlu0 %632
        %v636 = vadd.f32 %v624, %v631
        %v637 = vadd.f32 %v625, %v633
        %v638 = vadd.f32 %v636, 1e-05
        %v639 = vadd.f32 %v637, 1e-05
        %v640 = vrsqrt.pop %v638
        %v641 = vmul.f32 %v640, %v638
        %v642 = vmul.f32 %v641, %v640
        %v643 = vmul.f32 0.5, %v642
        %v644 = vsub.f32 1.5, %v643
        %v645 = vmul.f32 %v640, %v644
        %vm646 = vweird.f32 %v638
        %vm647 = vweird.f32 %v640
        %vm648 = vmor %vm646, %vm647
        %v649 = vsel %vm648, %v640, %v645
        %v650 = vrsqrt.pop %v639
        %v651 = vmul.f32 %v650, %v639
        %v652 = vmul.f32 %v651, %v650
        %v653 = vmul.f32 0.5, %v652
        %v654 = vsub.f32 1.5, %v653
        %v655 = vmul.f32 %v650, %v654
        %vm656 = vweird.f32 %v639
        %vm657 = vweird.f32 %v650
        %vm658 = vmor %vm656, %vm657
        %v659 = vsel %vm658, %v650, %v655
        %v660 = vld [vmem:[#allocation7] sm:$0x1]
        %v661 = vld [vmem:[#allocation7 + $0x1] sm:$0x1]
        %v662 = vld [vmem:[#allocation7 + $0x2] sm:$0x1]
        %v663 = vld [vmem:[#allocation7 + $0x3] sm:$0x1]
        %v664 = vld [vmem:[#allocation9] sm:$0x1]
        %v665 = vld [vmem:[#allocation9 + $0x1] sm:$0x1]
        %v666 = vld [vmem:[#allocation9 + $0x2] sm:$0x1]
        %v667 = vld [vmem:[#allocation9 + $0x3] sm:$0x1]
        %669 = vset.pattern.permute.xlu0 0
        %670 = vperm.xlu0 %669, %v608
        %v671 = vpop.permute.xlu0 %670
        %674 = vset.pattern.permute.xlu0 0
        %675 = vperm.xlu0 %674, %v609
        %v676 = vpop.permute.xlu0 %675
        %v678 = vsub.f32 %v264, %v671
        %v679 = vsub.f32 %v265, %v676
        %v680 = vsub.f32 %v266, %v671
        %v681 = vsub.f32 %v267, %v676
        %v682 = vsub.f32 %v268, %v671
        %v683 = vsub.f32 %v269, %v676
        %v684 = vsub.f32 %v270, %v671
        %v685 = vsub.f32 %v271, %v676
        %687 = vset.pattern.permute.xlu0 1
        %688 = vperm.xlu0 %687, %v649
        %v689 = vpop.permute.xlu0 %688
        %692 = vset.pattern.permute.xlu0 1
        %693 = vperm.xlu0 %692, %v659
        %v694 = vpop.permute.xlu0 %693
        %v696 = vmul.f32 %v678, %v689
        %v697 = vmul.f32 %v679, %v694
        %v698 = vmul.f32 %v680, %v689
        %v699 = vmul.f32 %v681, %v694
        %v700 = vmul.f32 %v682, %v689
        %v701 = vmul.f32 %v683, %v694
        %v702 = vmul.f32 %v684, %v689
        %v703 = vmul.f32 %v685, %v694
        %v708 = vperm.slane %v660, 0
        %v709 = vperm.slane %v661, 0
        %v710 = vperm.slane %v662, 0
        %v711 = vperm.slane %v663, 0
        %v716 = vmul.f32 %v696, %v708
        %v717 = vmul.f32 %v697, %v708
        %v718 = vmul.f32 %v698, %v709
        %v719 = vmul.f32 %v699, %v709
        %v720 = vmul.f32 %v700, %v710
        %v721 = vmul.f32 %v701, %v710
        %v722 = vmul.f32 %v702, %v711
        %v723 = vmul.f32 %v703, %v711
        %v728 = vperm.slane %v664, 0
        %v729 = vperm.slane %v665, 0
        %v730 = vperm.slane %v666, 0
        %v731 = vperm.slane %v667, 0
        %v736 = vadd.f32 %v716, %v728
        %v737 = vadd.f32 %v717, %v728
        %v738 = vadd.f32 %v718, %v729
        %v739 = vadd.f32 %v719, %v729
        %v740 = vadd.f32 %v720, %v730
        %v741 = vadd.f32 %v721, %v730
        %v742 = vadd.f32 %v722, %v731
        %v743 = vadd.f32 %v723, %v731
        %744 = vst.msk [vmem:[%s241] sm:$0xff] %vm272, %v736
        %745 = vst.msk [vmem:[%s241 + $0x8] sm:$0xff] %vm272, %v737
        %746 = vst.msk [vmem:[%s241 + $0x10] sm:$0xff] %vm272, %v738
        %747 = vst.msk [vmem:[%s241 + $0x18] sm:$0xff] %vm272, %v739
        %748 = vst.msk [vmem:[%s241 + $0x20] sm:$0xff] %vm272, %v740
        %749 = vst.msk [vmem:[%s241 + $0x28] sm:$0xff] %vm272, %v741
        %750 = vst.msk [vmem:[%s241 + $0x30] sm:$0xff] %vm272, %v742
        %751 = vst.msk [vmem:[%s241 + $0x38] sm:$0xff] %vm272, %v743
        %s752 = sand.u32 %s113, 1
        %s753 = scalar_lea.sflag [#allocation6], %s752
        %s754 = sand.u32 %s113, 1
        %s755 = smul.addr %s754, 64
        %s756 = scalar_lea.vmem [#allocation10], %s755
        // Predicated region
        $region49: #{tpu_custom_call.1} parent=31 // pred_check
          %p757 = pneg %p123
        $region50: #{tpu_custom_call.1} parent=31 // pred_check_branch
          %759 = sbr.rel (%p757) target = $region52
        $region51: #{tpu_custom_call.1} parent=31 // pred_region
          %s760 = smul.u32 2, %s26
          %762 = vsyncadd %s753, 0
          %s763 = smul.addr %s25, 8
          %s764 = sadd.s32 %s760, %s763
          %s765 = smul.addr %s764, 8
          %s766 = scalar_lea.hbm %s3, %s765
          %s767 = sshll.u32 %s756, 4
          %s768 = int_to_ptr.vmem [resolvable:$true] %s767
          %s769 = sshll.u32 %s766, 4
          %s770 = int_to_ptr.hbm [resolvable:$true] %s769
          %775 = dma.vmem_to_hbm [thread:$0]  %s768, 1024, %s770, %s753, 128, 128, 8
        $region52: #{tpu_custom_call.1} parent=31 // pred_fallthru
          _
      $region32: #{tpu_custom_call.1} parent=5 // pred_fallthru
        _
      %p776 = scmp.le.s32.totalorder 2, %s16
      // Predicated region
      $region53: #{tpu_custom_call.1} parent=5 // pred_check
        %p777 = pneg %p776
      $region54: #{tpu_custom_call.1} parent=5 // pred_check_branch
        %779 = sbr.rel (%p777) target = $region56
      $region55: #{tpu_custom_call.1} parent=5 // pred_region
        %s780 = ssub.s32 %s16, 2
        // Predicated region
        $region57: #{tpu_custom_call.1} parent=55 // pred_check
          %p781 = pneg %p129
        $region58: #{tpu_custom_call.1} parent=55 // pred_check_branch
          %783 = sbr.rel (%p781) target = $region60
        $region59: #{tpu_custom_call.1} parent=55 // pred_region
          %s784 = sand.u32 %s114, 1
          %s785 = scalar_lea.sflag [#allocation6], %s784
          %s786 = sand.u32 %s114, 1
          %s787 = smul.addr %s786, 64
          %s788 = scalar_lea.vmem [#allocation10], %s787
          %790 = dma.done %s785, 1024
        $region60: #{tpu_custom_call.1} parent=55 // pred_fallthru
          _
      $region56: #{tpu_custom_call.1} parent=5 // pred_fallthru
        _
    $region6: #{tpu_custom_call.1} parent=1 // loop_footer
      %s20 = sadd.s32 1, %s16
    $region7: #{tpu_custom_call.1} parent=1 // loop_footer_branch
      %15 = sbr.rel target = $region3
    $region8: #{tpu_custom_call.1} parent=1 // loop_exit
      _
    %791 = vsyncpa [#allocation5], 1
    %s792 = scalar_lea.sflag [#allocation5], 1
    %793 = vsyncpa %s792, 1
    %794 = vsyncpa [#allocation8], 1
    %795 = vsyncpa [#allocation6], 1
    %s796 = scalar_lea.sflag [#allocation6], 1
    %797 = vsyncpa %s796, 1

</llo_original>
